<compile_context>
chip_gen: v6e
topology: v6e:2x2x1
jax: 0.10.0
libtpu: 0.0.40
codegen_flags: <defaults>
</compile_context>

<pallas_src>
import functools

import jax
import jax.numpy as jnp
from jax.experimental import pallas as pl
from jax.experimental.pallas import tpu as pltpu


# ---------------------------------------------------------------------------
# Kernels
# ---------------------------------------------------------------------------
def _masked_cast(f_ref, *, k_step, tk, k_cols, compute_dtype):
    """Load the current (N, tk) F tile, zero out-of-range K columns (only
    generated when the last tile is partial), cast to the compute dtype."""
    fb = f_ref[...]
    if k_cols % tk != 0:
        # Last tile extends past K: the boundary-block DMA yields unspecified
        # data there, so select it to zero before it reaches the MXU.
        col = k_step * tk + jax.lax.broadcasted_iota(jnp.int32, fb.shape, 1)
        fb = jnp.where(col < k_cols, fb, jnp.zeros_like(fb))
    return fb.astype(compute_dtype)


def _gram_kernel(f_ref, g_ref, *, inv_denom, compute_dtype, k_cols, tk):
    """grid = (nk,). Accumulate F @ F^T directly in the resident output."""
    k = pl.program_id(0)

    @pl.when(k == 0)
    def _():
        g_ref[...] = jnp.zeros_like(g_ref)

    fb = _masked_cast(f_ref, k_step=k, tk=tk, k_cols=k_cols,
                      compute_dtype=compute_dtype)
    # Contract the last dims of both operands (no explicit transpose of fb).
    g_ref[...] += jax.lax.dot_general(
        fb, fb,
        dimension_numbers=(((1,), (1,)), ((), ())),
        preferred_element_type=jnp.float32)

    @pl.when(k == pl.num_programs(0) - 1)
    def _():
        g_ref[...] *= inv_denom


def _gram_mse_kernel(f_ref, t_ref, g_ref, loss_ref, *, inv_denom, inv_count,
                     compute_dtype, k_cols, tk):
    """grid = (nk,). Same as _gram_kernel but the MSE against the resident
    target gram is computed in the finalize step (SMEM scalar output)."""
    k = pl.program_id(0)

    @pl.when(k == 0)
    def _():
        g_ref[...] = jnp.zeros_like(g_ref)

    fb = _masked_cast(f_ref, k_step=k, tk=tk, k_cols=k_cols,
                      compute_dtype=compute_dtype)
    g_ref[...] += jax.lax.dot_general(
        fb, fb,
        dimension_numbers=(((1,), (1,)), ((), ())),
        preferred_element_type=jnp.float32)

    @pl.when(k == pl.num_programs(0) - 1)
    def _():
        g = g_ref[...] * inv_denom
        g_ref[...] = g
        d = g - t_ref[...]
        loss_ref[0, 0] = jnp.sum(d * d) * inv_count


# ---------------------------------------------------------------------------
# Tiling helpers
# ---------------------------------------------------------------------------
_MAX_TK = 8192          # per-step overhead fully amortized well before this
_SLACK = 4 << 20        # headroom for compiler scratch / semaphores


def _round_up(x, m):
    return -(-x // m) * m


def _vmem_budget_bytes():
    """~70% of this generation's VMEM (64 MiB on v7x, 128 MiB on v5e/v6e)."""
    cap = 64 << 20
    try:
        cap = int(getattr(pltpu.get_tpu_info(), "vmem_capacity_bytes", cap))
    except Exception:
        pass
    return max(24 << 20, min(int(cap * 0.70), 96 << 20))


def _choose_k_tiling(N, K, resident_bytes, stream_itemsize, budget,
                     max_tk=_MAX_TK):
    """Split K into near-equal tiles whose double-buffered stream fits VMEM.

    Returns (tk, nk).  When everything fits in one tile, tk == K exactly (no
    padding, no masking).  Otherwise tk is a multiple of 128 and the last tile
    is masked in-kernel.
    """
    avail = budget - resident_bytes - _SLACK
    fit = avail // (2 * N * stream_itemsize)          # 2 stream buffers
    fit = min(int(fit), int(max_tk))
    fit = max(128, (fit // 128) * 128)
    # TODO(synk): no graceful fallback (output tiling) if the resident (N, N)
    # blocks alone exceed VMEM for very large N; style-loss N is <= ~512.
    if K <= fit:
        return K, 1
    nk = -(-K // fit)
    tk = _round_up(-(-K // nk), 128)                  # near-even, <=128 waste/tile
    nk = -(-K // tk)
    return tk, nk


# ---------------------------------------------------------------------------
# Wrappers
# ---------------------------------------------------------------------------
def gram_matrix(x, *, compute_dtype=jnp.bfloat16, max_tk=_MAX_TK):
    """Pallas gram matrix of an NCHW tensor: (a*b, a*b) float32.

    `compute_dtype` is the dtype F is multiplied in on the MXU (bf16 default,
    recommended on v5e where f32 MXU is multi-pass); accumulation is always
    float32.  F is streamed from HBM in x's native dtype and cast on-chip.
    """
    a, b, c, d = x.shape
    N, K = a * b, c * d
    inv_denom = 1.0 / float(a * b * c * d)
    f = x.reshape(N, K)                               # view-like, no HBM copy
    itemsize = jnp.dtype(f.dtype).itemsize
    budget = _vmem_budget_bytes()
    resident = 2 * N * N * 4                          # f32 gram output
    tk, nk = _choose_k_tiling(N, K, resident, itemsize, budget, max_tk)

    kernel = functools.partial(_gram_kernel, inv_denom=inv_denom,
                               compute_dtype=compute_dtype, k_cols=K, tk=tk)
    return pl.pallas_call(
        kernel,
        out_shape=jax.ShapeDtypeStruct((N, N), jnp.float32),
        grid_spec=pltpu.PrefetchScalarGridSpec(
            num_scalar_prefetch=0,
            grid=(nk,),
            in_specs=[pl.BlockSpec((N, tk), lambda k: (0, k))],
            out_specs=pl.BlockSpec((N, N), lambda k: (0, 0)),
        ),
        compiler_params=pltpu.CompilerParams(
            dimension_semantics=("arbitrary",),
            vmem_limit_bytes=budget),
    )(f)


def gram_and_mse(x, target_g, *, compute_dtype=jnp.bfloat16, max_tk=_MAX_TK):
    """Fused: gram(x) and mse(gram(x), target_g) in a single pallas_call."""
    a, b, c, d = x.shape
    N, K = a * b, c * d
    inv_denom = 1.0 / float(a * b * c * d)
    inv_count = 1.0 / float(N * N)
    f = x.reshape(N, K)
    itemsize = jnp.dtype(f.dtype).itemsize
    budget = _vmem_budget_bytes()
    resident = 4 * N * N * 4                          # gram out + target (f32)
    tk, nk = _choose_k_tiling(N, K, resident, itemsize, budget, max_tk)

    kernel = functools.partial(_gram_mse_kernel, inv_denom=inv_denom,
                               inv_count=inv_count, compute_dtype=compute_dtype,
                               k_cols=K, tk=tk)
    g, loss = pl.pallas_call(
        kernel,
        out_shape=(jax.ShapeDtypeStruct((N, N), jnp.float32),
                   jax.ShapeDtypeStruct((1, 1), jnp.float32)),
        grid_spec=pltpu.PrefetchScalarGridSpec(
            num_scalar_prefetch=0,
            grid=(nk,),
            in_specs=[pl.BlockSpec((N, tk), lambda k: (0, k)),
                      pl.BlockSpec((N, N), lambda k: (0, 0))],   # resident tgt
            out_specs=(pl.BlockSpec((N, N), lambda k: (0, 0)),
                       pl.BlockSpec(memory_space=pltpu.SMEM)),
        ),
        compiler_params=pltpu.CompilerParams(
            dimension_semantics=("arbitrary",),
            vmem_limit_bytes=budget),
    )(f, target_g.astype(jnp.float32))
    return g, loss[0, 0]


def style_loss_forward(x, target_g, *, compute_dtype=jnp.bfloat16,
                       max_tk=_MAX_TK):
    """Returns (input pass-through, mse loss scalar, gram matrix)."""
    g, loss = gram_and_mse(x, target_g, compute_dtype=compute_dtype,
                           max_tk=max_tk)
    return x, loss, g


class StyleLoss:
    """JAX/Pallas mirror of the PyTorch StyleLoss module."""

    def __init__(self, target_feature, compute_dtype=jnp.bfloat16):
        self.compute_dtype = compute_dtype
        # Target gram (already "detached" — plain array, no autograd state).
        self.target = gram_matrix(target_feature, compute_dtype=compute_dtype)
        self.loss = None

    def __call__(self, x):
        out, loss, _ = style_loss_forward(x, self.target,
                                          compute_dtype=self.compute_dtype)
        self.loss = loss
        return out


# ---------------------------------------------------------------------------
# Demo / self-check
# ---------------------------------------------------------------------------
if __name__ == "__main__":
    root = jax.random.PRNGKey(0)

    def ref_gram(t):
        a, b, c, d = t.shape
        f = t.reshape(a * b, c * d).astype(jnp.float32)
        return (f @ f.T) / (a * b * c * d)

    def ref_loss(x, tgt):
        return jnp.mean((ref_gram(x) - ref_gram(tgt)) ** 2)

    def run_case(idx, shape, compute_dtype, rel_tol, max_tk=_MAX_TK):
        k_tgt, k_in = jax.random.split(jax.random.fold_in(root, idx))
        tgt = jax.random.normal(k_tgt, shape, dtype=jnp.float32)
        x = jax.random.normal(k_in, shape, dtype=jnp.float32)

        target_g = gram_matrix(tgt, compute_dtype=compute_dtype, max_tk=max_tk)
        out, loss, _ = style_loss_forward(
            x, target_g, compute_dtype=compute_dtype, max_tk=max_tk)
        out = jax.block_until_ready(out)
        loss = float(jax.block_until_ready(loss))

        assert out.shape == x.shape and bool(jnp.all(out == x)), (
            f"case {idx}: forward must be a pass-through")
        ref = float(ref_loss(x, tgt))
        # Scale-aware tolerance: covers TPU matmul precision-mode differences
        # (f32 reference vs. MXU passes / bf16 streaming) while still catching
        # structural bugs (wrong denom, dropped/duplicated tile, bad mask).
        assert abs(loss - ref) <= rel_tol * abs(ref) + 1e-9, (
            f"case {idx}: loss {loss} vs ref {ref}")

    # 1) small shape, exact f32 compute (single K tile, tk == K).
    run_case(1, (2, 4, 16, 16), jnp.float32, rel_tol=2e-2)
    # 2) same shape, bf16 MXU compute (default fast path), looser tolerance.
    run_case(2, (2, 4, 16, 16), jnp.bfloat16, rel_tol=1e-1)
    # 3) multi-tile K reduction (max_tk=128 forces 2 K tiles): validates the
    #    zero-init / accumulate / finalize+fused-MSE path of the resident out.
    run_case(3, (2, 4, 16, 16), jnp.float32, rel_tol=2e-2, max_tk=128)
    # 4) K not a multiple of 128 -> single full-extent tile (tk == K == 100).
    run_case(4, (2, 4, 10, 10), jnp.float32, rel_tol=2e-2)
    # 5) K not a multiple of the tile -> masked last tile in-kernel.
    run_case(5, (2, 4, 12, 15), jnp.float32, rel_tol=2e-2, max_tk=128)
    # 6) N = 256 -> stays on the 1-D streamed path (no row re-streaming).
    run_case(6, (1, 256, 32, 32), jnp.float32, rel_tol=2e-2)

    # Class-based mirror of the PyTorch module (bf16 default fast path).
    module = StyleLoss(jax.random.normal(jax.random.fold_in(root, 10),
                                         (2, 4, 16, 16), dtype=jnp.float32))
    x = jax.random.normal(jax.random.fold_in(root, 11),
                          (2, 4, 16, 16), dtype=jnp.float32)
    out = jax.block_until_ready(module(x))
    loss = jax.block_until_ready(module.loss)
    assert out.shape == x.shape and bool(jnp.all(out == x))
    assert bool(jnp.isfinite(loss))

    print("KERNEL_OK")
</pallas_src>

<mosaic_0001>
module attributes {stable_mosaic.version = 11 : i64} {
  func.func @_gram_kernel(%arg0: i32, %arg1: memref<8x256xf32, #tpu.memory_space<vmem>>, %arg2: memref<8x8xf32, #tpu.memory_space<vmem>>) attributes {dimension_semantics = [#tpu.dimension_semantics<arbitrary>], iteration_bounds = array<i64: 1>, scalar_prefetch = 0 : i64, scratch_operands = 0 : i64, tpu.core_type = #tpu.core_type<tc>, window_params = [{transform_indices = @transform_0, window_bounds = array<i64: 8, 256>}, {pipeline_mode = #tpu.pipeline_mode<synchronous>, transform_indices = @transform_1, window_bounds = array<i64: 8, 8>}]} {
    %c0_i32 = arith.constant 0 : i32
    %0 = arith.cmpi eq, %arg0, %c0_i32 : i32
    %1 = arith.extui %0 : i1 to i32
    %c0_i32_0 = arith.constant 0 : i32
    %2 = arith.cmpi ne, %1, %c0_i32_0 : i32
    scf.if %2 {
      %cst_8 = arith.constant 0.000000e+00 : f32
      %11 = vector.broadcast %cst_8 : f32 to vector<8x8xf32>
      %c0_9 = arith.constant 0 : index
      %c0_10 = arith.constant 0 : index
      %12 = vector.load %arg2[%c0_9, %c0_10] : memref<8x8xf32, #tpu.memory_space<vmem>>, vector<8x8xf32>
      tpu.vector_store %arg2[%c0_9, %c0_10], %11 {strides = array<i32>} : memref<8x8xf32, #tpu.memory_space<vmem>>, vector<8x8xf32>,
    } else {
    }
    %c0 = arith.constant 0 : index
    %c0_1 = arith.constant 0 : index
    %3 = vector.load %arg1[%c0, %c0_1] : memref<8x256xf32, #tpu.memory_space<vmem>>, vector<8x256xf32>
    %c0_2 = arith.constant 0 : index
    %c0_3 = arith.constant 0 : index
    %4 = vector.load %arg2[%c0_2, %c0_3] : memref<8x8xf32, #tpu.memory_space<vmem>>, vector<8x8xf32>
    %cst = arith.constant dense<0.000000e+00> : vector<8x8xf32>
    %5 = tpu.matmul %3, %3, %cst {dimension_numbers = #tpu.dot_dimension_numbers<[1], [1], [0], [0], [0, 0, 1, 0], [], []>} : vector<8x256xf32>, vector<8x256xf32>, vector<8x8xf32> -> vector<8x8xf32>
    %6 = arith.addf %4, %5 : vector<8x8xf32>
    %c0_4 = arith.constant 0 : index
    %c0_5 = arith.constant 0 : index
    %7 = vector.load %arg2[%c0_4, %c0_5] : memref<8x8xf32, #tpu.memory_space<vmem>>, vector<8x8xf32>
    tpu.vector_store %arg2[%c0_4, %c0_5], %6 {strides = array<i32>} : memref<8x8xf32, #tpu.memory_space<vmem>>, vector<8x8xf32>,
    %c0_i32_6 = arith.constant 0 : i32
    %8 = arith.cmpi eq, %arg0, %c0_i32_6 : i32
    %9 = arith.extui %8 : i1 to i32
    %c0_i32_7 = arith.constant 0 : i32
    %10 = arith.cmpi ne, %9, %c0_i32_7 : i32
    scf.if %10 {
      %c0_8 = arith.constant 0 : index
      %c0_9 = arith.constant 0 : index
      %11 = vector.load %arg2[%c0_8, %c0_9] : memref<8x8xf32, #tpu.memory_space<vmem>>, vector<8x8xf32>
      %cst_10 = arith.constant 4.8828125E-4 : f32
      %12 = vector.broadcast %cst_10 : f32 to vector<8x8xf32>
      %13 = arith.mulf %11, %12 : vector<8x8xf32>
      %c0_11 = arith.constant 0 : index
      %c0_12 = arith.constant 0 : index
      %14 = vector.load %arg2[%c0_11, %c0_12] : memref<8x8xf32, #tpu.memory_space<vmem>>, vector<8x8xf32>
      tpu.vector_store %arg2[%c0_11, %c0_12], %13 {strides = array<i32>} : memref<8x8xf32, #tpu.memory_space<vmem>>, vector<8x8xf32>,
    } else {
    }
    return
  }
  func.func @transform_0(%arg0: i32) -> (i32, i32) {
    %c0_i32 = arith.constant 0 : i32
    %c0_i32_0 = arith.constant 0 : i32
    return %c0_i32, %arg0 : i32, i32
  }
  func.func @transform_1(%arg0: i32) -> (i32, i32) {
    %c0_i32 = arith.constant 0 : i32
    %c0_i32_0 = arith.constant 0 : i32
    %c0_i32_1 = arith.constant 0 : i32
    return %c0_i32, %c0_i32_0 : i32, i32
  }
}

</mosaic_0001>

<llo_original>
// kernel: tpu_custom_call.1
$region0: #{tpu_custom_call.1}
  #allocation0 [shape = 'u32[]', space=smem, size = 0x4, offset = 0x4, fixed_abs, tag = 'smem constant byte address 0x4 - core index']
  #allocation1 [shape = 'u32[144,128]{1,0:T(1,128)}', space=vmem, size = 0x12000, scoped, tag = 'internal scratch']
  %s0 = inlined_call_operand.hbm [shape: f32[8,256], index: 0, kind: input, shape index: {}]
  %s1 = inlined_call_operand.hbm [shape: f32[8,8], index: 1, kind: output, shape index: {}]
  %s2 = sld [smem:[#allocation0]]
  $region26: #{tpu_custom_call.1} parent=0
    _
  %s4 = ssub.s32 1, %s2
  %s5 = scalar_select 0, %s4, %s2
  $region1: #{tpu_custom_call.1} parent=0
    #allocation2 [shape = 'u8[8192]{0}', space=vmem, size = 0x2000, scoped, tag = 'input window, operand 0, single buffered']
    #allocation3 [shape = 's32[1]{0}', space=sflag, size = 0x4, scoped, tag = 'scoped memory for tpu_custom_call.1']
    #allocation4 [shape = 's32[1]{0}', space=sflag, size = 0x4, scoped, tag = 'scoped memory for tpu_custom_call.1']
    #allocation5 [shape = 'u8[4096]{0}', space=vmem, size = 0x1000, scoped, tag = 'output window, operand 0, single buffered']
    %6 = vsyncpa [#allocation3], 0
    %7 = vsyncpa [#allocation4], 0
    // Predicated region
    $region2: #{tpu_custom_call.1} parent=1 // pred_check
      _
    $region3: #{tpu_custom_call.1} parent=1 // pred_check_branch
      %9 = sbr.rel (0) target = $region5
    $region4: #{tpu_custom_call.1} parent=1 // pred_region
      %s11 = ssub.s32 256, 256
      %12 = vsyncadd [#allocation3], %s11
      %s14 = sshll.u32 [#allocation2], 4
      %s15 = int_to_ptr.vmem [resolvable:$true] %s14
      %17 = dma.hbm_to_vmem [thread:$0]  %s0, 256, %s15, [#allocation3]
    $region5: #{tpu_custom_call.1} parent=1 // pred_fallthru
      _
    // Predicated region
    $region6: #{tpu_custom_call.1} parent=1 // pred_check
      _
    $region7: #{tpu_custom_call.1} parent=1 // pred_check_branch
      %19 = sbr.rel (0) target = $region9
    $region8: #{tpu_custom_call.1} parent=1 // pred_region
      %20 = dma.done [#allocation3], 256
    $region9: #{tpu_custom_call.1} parent=1 // pred_fallthru
      _
    %p21 = scmp.eq.s32.totalorder 0, 0
    // Predicated region
    $region10: #{tpu_custom_call.1} parent=1 // pred_check
      %p22 = pneg %p21
    $region11: #{tpu_custom_call.1} parent=1 // pred_check_branch
      %24 = sbr.rel (%p22) target = $region13
    $region12: #{tpu_custom_call.1} parent=1 // pred_region
      %vm25 = vcmask 64512
      %26 = vst.msk [vmem:[#allocation5] sm:$0xff] %vm25, 0.0
    $region13: #{tpu_custom_call.1} parent=1 // pred_fallthru
      _
    %v27 = vld [vmem:[#allocation2] sm:$0xff]
    %v28 = vld [vmem:[#allocation2 + $0x8] sm:$0xff]
    %v29 = vld [vmem:[#allocation5] sm:$0xff]
    %30 = vmatprep.subr.mxu0 0.0
    %31 = vmatpush1.xpose.msra.mxu0 0.0
    %32 = vmatprep.subr.mxu0 0.0
    %33 = vmatpush1.xpose.msra.mxu0 0.0
    %34 = vmatprep.subr.mxu0 0.0
    %35 = vmatpush1.xpose.msra.mxu0 0.0
    %36 = vmatprep.subr.mxu0 0.0
    %37 = vmatpush1.xpose.msra.mxu0 0.0
    %38 = vmatprep.subr.mxu0 0.0
    %39 = vmatpush1.xpose.msra.mxu0 0.0
    %40 = vmatprep.subr.mxu0 0.0
    %41 = vmatpush1.xpose.msra.mxu0 0.0
    %42 = vmatprep.subr.mxu0 0.0
    %43 = vmatpush1.xpose.msra.mxu0 0.0
    %44 = vmatprep.subr.mxu0 0.0
    %45 = vmatpush1.xpose.msra.mxu0 0.0
    %46 = vmatprep.subr.mxu0 0.0
    %47 = vmatpush1.xpose.msra.mxu0 0.0
    %48 = vmatprep.subr.mxu0 0.0
    %49 = vmatpush1.xpose.msra.mxu0 0.0
    %50 = vmatprep.subr.mxu0 0.0
    %51 = vmatpush1.xpose.msra.mxu0 0.0
    %52 = vmatprep.subr.mxu0 0.0
    %53 = vmatpush1.xpose.msra.mxu0 0.0
    %54 = vmatprep.subr.mxu0 0.0
    %55 = vmatpush1.xpose.msra.mxu0 0.0
    %56 = vmatprep.subr.mxu0 0.0
    %57 = vmatpush1.xpose.msra.mxu0 0.0
    %58 = vmatprep.subr.mxu0 0.0
    %59 = vmatpush1.xpose.msra.mxu0 0.0
    %60 = vmatprep.subr.mxu0 %v28
    %61 = vmatpush1.xpose.msra.mxu0 %v27
    %62 = vmatprep.subr.mxu0 0.0
    %63 = vmatpush2.xpose.msra.mxu0 0.0
    %64 = vmatprep.subr.mxu0 0.0
    %65 = vmatpush2.xpose.msra.mxu0 0.0
    %66 = vmatprep.subr.mxu0 0.0
    %67 = vmatpush2.xpose.msra.mxu0 0.0
    %68 = vmatprep.subr.mxu0 0.0
    %69 = vmatpush2.xpose.msra.mxu0 0.0
    %70 = vmatprep.subr.mxu0 0.0
    %71 = vmatpush2.xpose.msra.mxu0 0.0
    %72 = vmatprep.subr.mxu0 0.0
    %73 = vmatpush2.xpose.msra.mxu0 0.0
    %74 = vmatprep.subr.mxu0 0.0
    %75 = vmatpush2.xpose.msra.mxu0 0.0
    %76 = vmatprep.subr.mxu0 0.0
    %77 = vmatpush2.xpose.msra.mxu0 0.0
    %78 = vmatprep.subr.mxu0 0.0
    %79 = vmatpush2.xpose.msra.mxu0 0.0
    %80 = vmatprep.subr.mxu0 0.0
    %81 = vmatpush2.xpose.msra.mxu0 0.0
    %82 = vmatprep.subr.mxu0 0.0
    %83 = vmatpush2.xpose.msra.mxu0 0.0
    %84 = vmatprep.subr.mxu0 0.0
    %85 = vmatpush2.xpose.msra.mxu0 0.0
    %86 = vmatprep.subr.mxu0 0.0
    %87 = vmatpush2.xpose.msra.mxu0 0.0
    %88 = vmatprep.subr.mxu0 0.0
    %89 = vmatpush2.xpose.msra.mxu0 0.0
    %90 = vmatprep.subr.mxu0 0.0
    %91 = vmatpush2.xpose.msra.mxu0 0.0
    %92 = vmatprep.subr.mxu0 0.0
    %93 = vmatpush2.xpose.msra.mxu0 0.0
    %94 = vmatprep.mubr.f32.mxu0 %v28
    %95 = vmatmul.mubr.f32.gmra.mxu0 %v27
    %v96 = vpop.f32.mrf.mxu0
    %v97 = vadd.f32 0.0, %v96
    %v98 = vpop.f32.mrf.mxu0
    %99 = vdwg.mxu0
    %v100 = vadd.f32 %v29, %v97
    %vm101 = vcmask 64512
    %102 = vst.msk [vmem:[#allocation5] sm:$0xff] %vm101, %v100
    // Predicated region
    $region14: #{tpu_custom_call.1} parent=1 // pred_check
      %p103 = pneg %p21
    $region15: #{tpu_custom_call.1} parent=1 // pred_check_branch
      %105 = sbr.rel (%p103) target = $region17
    $region16: #{tpu_custom_call.1} parent=1 // pred_region
      %v106 = vld [vmem:[#allocation5] sm:$0xff]
      %v107 = vmul.f32 %v106, 0.00048828125
      %108 = vst.msk [vmem:[#allocation5] sm:$0xff] %vm101, %v107
    $region17: #{tpu_custom_call.1} parent=1 // pred_fallthru
      _
    // Predicated region
    $region18: #{tpu_custom_call.1} parent=1 // pred_check
      _
    $region19: #{tpu_custom_call.1} parent=1 // pred_check_branch
      %110 = sbr.rel (0) target = $region21
    $region20: #{tpu_custom_call.1} parent=1 // pred_region
      %s112 = ssub.s32 128, 128
      %113 = vsyncadd [#allocation4], %s112
      %s115 = sshll.u32 [#allocation5], 4
      %s116 = int_to_ptr.vmem [resolvable:$true] %s115
      %118 = dma.vmem_to_hbm [thread:$0]  %s116, 128, %s1, [#allocation4]
    $region21: #{tpu_custom_call.1} parent=1 // pred_fallthru
      _
    // Predicated region
    $region22: #{tpu_custom_call.1} parent=1 // pred_check
      _
    $region23: #{tpu_custom_call.1} parent=1 // pred_check_branch
      %120 = sbr.rel (0) target = $region25
    $region24: #{tpu_custom_call.1} parent=1 // pred_region
      %121 = dma.done [#allocation4], 128
    $region25: #{tpu_custom_call.1} parent=1 // pred_fallthru
      _
    %122 = vsyncpa [#allocation3], 1
    %123 = vsyncpa [#allocation4], 1

</llo_original>
